<compile_context>
chip_gen: v7x
topology: tpu7x:2x2x1
jax: 0.10.0
libtpu: 0.0.40
codegen_flags: <defaults>
</compile_context>

<pallas_src>
import jax
import jax.numpy as jnp
from jax.experimental import pallas as pl
from jax.experimental.pallas import tpu as pltpu


_HID = 128  # lane-padded hidden width (true widths are 100, 100, 10)


def _ff_kernel(x_ref,
               w1_ref, b1_ref,
               w2_ref, b2_ref,
               w3_ref, b3_ref,
               w4_ref, b4_ref,
               o_ref):
    x = x_ref[...].astype(jnp.float32)                                    # (tb, 15)

    h1 = jnp.dot(x, w1_ref[...], preferred_element_type=jnp.float32) + b1_ref[...]
    h1 = jnp.maximum(h1, 0.0)                                             # (tb, 128)

    h2 = jnp.dot(h1, w2_ref[...], preferred_element_type=jnp.float32) + b2_ref[...]
    h2 = jnp.maximum(h2, 0.0)                                             # (tb, 128)

    h3 = jnp.dot(h2, w3_ref[...], preferred_element_type=jnp.float32) + b3_ref[...]
    h3 = jnp.maximum(h3, 0.0)                                             # (tb, 128); cols >= 10 are exactly 0

    # Layer 4 (10 -> 1): contract the weight ROW (1,128) against h3 (tb,128) over the
    # lane axis -> result is a lane-dense (1, tb) row, so the store is an unmasked
    # full-width vst rather than tb masked single-lane stores.
    row = jnp.einsum('ok,bk->ob', w4_ref[...], h3,
                     preferred_element_type=jnp.float32) + b4_ref[...]    # (1, tb)
    o_ref[...] = row[None].astype(o_ref.dtype)                            # (1, 1, tb)


def _round_up(n, m):
    return ((n + m - 1) // m) * m


def _pad2(a, rows, cols):
    r, c = a.shape
    return jnp.pad(a, ((0, rows - r), (0, cols - c)))


def ff_network_forward(x, params, *, tb=256):
    """x: (B, 15) float32.  params: dict of weights/biases.  Returns (B, 1)."""
    B, D_in = x.shape
    assert D_in == 15

    # --- choose the batch tile --------------------------------------------------
    # Big tiles fill the MXU M dimension and amortize the ~0.35us per-grid-step
    # pipeline overhead.  Keep at least 2 grid iterations when the batch allows it
    # so "parallel" grid sharding can feed both TensorCores (v7x megacore).
    half = _round_up(max(pl.cdiv(B, 2), 8), 8)
    tb_eff = max(8, min(int(tb), half))
    B_pad = _round_up(B, tb_eff)
    num_tiles = B_pad // tb_eff

    if B_pad != B:
        x = jnp.pad(x, ((0, B_pad - B), (0, 0)))

    # --- lane-pad the (tiny) parameters once, at trace time ----------------------
    f32 = jnp.float32
    w1 = _pad2(params["w1"].astype(f32), 15, _HID)       # (15, 128)
    b1 = _pad2(params["b1"].astype(f32), 1, _HID)        # (1, 128)
    w2 = _pad2(params["w2"].astype(f32), _HID, _HID)     # (128, 128)
    b2 = _pad2(params["b2"].astype(f32), 1, _HID)        # (1, 128)
    w3 = _pad2(params["w3"].astype(f32), _HID, _HID)     # (128, 128)
    b3 = _pad2(params["b3"].astype(f32), 1, _HID)        # (1, 128)
    w4 = _pad2(params["w4"].astype(f32).T, 1, _HID)      # (1, 128) row vector
    b4 = params["b4"].astype(f32).reshape(1, 1)          # (1, 1)

    def const_spec(shape):
        return pl.BlockSpec(shape, lambda i: (0,) * len(shape))

    flops = 2 * B_pad * (15 * 100 + 100 * 100 + 100 * 10 + 10 * 1)
    bytes_accessed = (B_pad * (15 + 1) * 4
                      + 4 * sum(int(a.size) for a in (w1, b1, w2, b2, w3, b3, w4, b4)))

    out = pl.pallas_call(
        _ff_kernel,
        out_shape=jax.ShapeDtypeStruct((num_tiles, 1, tb_eff), x.dtype),
        grid_spec=pltpu.PrefetchScalarGridSpec(
            num_scalar_prefetch=0,
            grid=(num_tiles,),
            in_specs=[
                pl.BlockSpec((tb_eff, 15), lambda i: (i, 0)),       # x tile
                const_spec((15, _HID)), const_spec((1, _HID)),      # W1, b1
                const_spec((_HID, _HID)), const_spec((1, _HID)),    # W2, b2
                const_spec((_HID, _HID)), const_spec((1, _HID)),    # W3, b3
                const_spec((1, _HID)), const_spec((1, 1)),          # w4 row, b4
            ],
            out_specs=pl.BlockSpec((1, 1, tb_eff), lambda i: (i, 0, 0)),
        ),
        compiler_params=pltpu.CompilerParams(
            dimension_semantics=("parallel",)),
        cost_estimate=pl.CostEstimate(
            flops=flops, transcendentals=0, bytes_accessed=bytes_accessed),
    )(x, w1, b1, w2, b2, w3, b3, w4, b4)

    # (num_tiles, 1, tb) flattens row-major straight back to padded-batch order.
    return out.reshape(B_pad, 1)[:B]


def init_params(key):
    """Matches nn.Linear's default init: U(-1/sqrt(fan_in), +1/sqrt(fan_in)).
    Weights stored as (in_features, out_features); biases as (1, out_features)."""
    dims = [(15, 100), (100, 100), (100, 10), (10, 1)]
    params = {}
    for idx, (fan_in, fan_out) in enumerate(dims, start=1):
        key, kw, kb = jax.random.split(key, 3)
        bound = 1.0 / jnp.sqrt(jnp.float32(fan_in))
        params[f"w{idx}"] = jax.random.uniform(
            kw, (fan_in, fan_out), jnp.float32, minval=-bound, maxval=bound)
        params[f"b{idx}"] = jax.random.uniform(
            kb, (1, fan_out), jnp.float32, minval=-bound, maxval=bound)
    return params


def ff_network_reference(x, params):
    h = x
    for idx in range(1, 5):
        h = h @ params[f"w{idx}"] + params[f"b{idx}"]
        if idx < 4:
            h = jnp.maximum(h, 0.0)
    return h


if __name__ == "__main__":
    key = jax.random.PRNGKey(0)
    kp, kx1, kx2 = jax.random.split(key, 3)

    params = init_params(kp)

    # Small batch (exercises the clamped tile + 2-iteration grid).
    B1 = 16
    x1 = jax.random.normal(kx1, (B1, 15), dtype=jnp.float32)
    out1 = jax.block_until_ready(ff_network_forward(x1, params))
    ref1 = ff_network_reference(x1, params)
    assert out1.shape == (B1, 1)
    assert jnp.allclose(out1, ref1, atol=1e-4, rtol=1e-4), "mismatch vs reference (B=16)"

    # Larger, non-tile-divisible batch (exercises tb=256 tiles + batch padding).
    B2 = 500
    x2 = jax.random.normal(kx2, (B2, 15), dtype=jnp.float32)
    out2 = jax.block_until_ready(ff_network_forward(x2, params))
    ref2 = ff_network_reference(x2, params)
    assert out2.shape == (B2, 1)
    assert jnp.allclose(out2, ref2, atol=1e-4, rtol=1e-4), "mismatch vs reference (B=500)"

    print("KERNEL_OK")
</pallas_src>

<mosaic_0001>
module attributes {stable_mosaic.version = 11 : i64} {
  func.func @_ff_kernel(%arg0: i32, %arg1: memref<8x15xf32, #tpu.memory_space<vmem>>, %arg2: memref<15x128xf32, #tpu.memory_space<vmem>>, %arg3: memref<1x128xf32, #tpu.memory_space<vmem>>, %arg4: memref<128x128xf32, #tpu.memory_space<vmem>>, %arg5: memref<1x128xf32, #tpu.memory_space<vmem>>, %arg6: memref<128x128xf32, #tpu.memory_space<vmem>>, %arg7: memref<1x128xf32, #tpu.memory_space<vmem>>, %arg8: memref<1x128xf32, #tpu.memory_space<vmem>>, %arg9: memref<1x1xf32, #tpu.memory_space<vmem>>, %arg10: memref<1x1x8xf32, #tpu.memory_space<vmem>>) attributes {dimension_semantics = [#tpu.dimension_semantics<parallel>], iteration_bounds = array<i64: 2>, scalar_prefetch = 0 : i64, scratch_operands = 0 : i64, tpu.core_type = #tpu.core_type<tc>, window_params = [{transform_indices = @transform_0, window_bounds = array<i64: 8, 15>}, {pipeline_mode = #tpu.pipeline_mode<synchronous>, transform_indices = @transform_1, window_bounds = array<i64: 15, 128>}, {pipeline_mode = #tpu.pipeline_mode<synchronous>, transform_indices = @transform_2, window_bounds = array<i64: 1, 128>}, {pipeline_mode = #tpu.pipeline_mode<synchronous>, transform_indices = @transform_3, window_bounds = array<i64: 128, 128>}, {pipeline_mode = #tpu.pipeline_mode<synchronous>, transform_indices = @transform_4, window_bounds = array<i64: 1, 128>}, {pipeline_mode = #tpu.pipeline_mode<synchronous>, transform_indices = @transform_5, window_bounds = array<i64: 128, 128>}, {pipeline_mode = #tpu.pipeline_mode<synchronous>, transform_indices = @transform_6, window_bounds = array<i64: 1, 128>}, {pipeline_mode = #tpu.pipeline_mode<synchronous>, transform_indices = @transform_7, window_bounds = array<i64: 1, 128>}, {pipeline_mode = #tpu.pipeline_mode<synchronous>, transform_indices = @transform_8, window_bounds = array<i64: 1, 1>}, {transform_indices = @transform_9, window_bounds = array<i64: 1, 1, 8>}]} {
    %c0 = arith.constant 0 : index
    %c0_0 = arith.constant 0 : index
    %0 = vector.load %arg1[%c0, %c0_0] : memref<8x15xf32, #tpu.memory_space<vmem>>, vector<8x15xf32>
    %c0_1 = arith.constant 0 : index
    %c0_2 = arith.constant 0 : index
    %1 = vector.load %arg2[%c0_1, %c0_2] : memref<15x128xf32, #tpu.memory_space<vmem>>, vector<15x128xf32>
    %cst = arith.constant dense<0.000000e+00> : vector<8x128xf32>
    %2 = tpu.matmul %0, %1, %cst {dimension_numbers = #tpu.dot_dimension_numbers<[1], [0], [0], [1], [0, 0, 1, 1], [], []>} : vector<8x15xf32>, vector<15x128xf32>, vector<8x128xf32> -> vector<8x128xf32>
    %c0_3 = arith.constant 0 : index
    %c0_4 = arith.constant 0 : index
    %3 = vector.load %arg3[%c0_3, %c0_4] : memref<1x128xf32, #tpu.memory_space<vmem>>, vector<1x128xf32>
    %4 = vector.broadcast %3 : vector<1x128xf32> to vector<8x128xf32>
    %5 = arith.addf %2, %4 : vector<8x128xf32>
    %cst_5 = arith.constant 0.000000e+00 : f32
    %6 = vector.broadcast %cst_5 : f32 to vector<8x128xf32>
    %7 = arith.maximumf %5, %6 : vector<8x128xf32>
    %c0_6 = arith.constant 0 : index
    %c0_7 = arith.constant 0 : index
    %8 = vector.load %arg4[%c0_6, %c0_7] : memref<128x128xf32, #tpu.memory_space<vmem>>, vector<128x128xf32>
    %cst_8 = arith.constant dense<0.000000e+00> : vector<8x128xf32>
    %9 = tpu.matmul %7, %8, %cst_8 {dimension_numbers = #tpu.dot_dimension_numbers<[1], [0], [0], [1], [0, 0, 1, 1], [], []>} : vector<8x128xf32>, vector<128x128xf32>, vector<8x128xf32> -> vector<8x128xf32>
    %c0_9 = arith.constant 0 : index
    %c0_10 = arith.constant 0 : index
    %10 = vector.load %arg5[%c0_9, %c0_10] : memref<1x128xf32, #tpu.memory_space<vmem>>, vector<1x128xf32>
    %11 = vector.broadcast %10 : vector<1x128xf32> to vector<8x128xf32>
    %12 = arith.addf %9, %11 : vector<8x128xf32>
    %cst_11 = arith.constant 0.000000e+00 : f32
    %13 = vector.broadcast %cst_11 : f32 to vector<8x128xf32>
    %14 = arith.maximumf %12, %13 : vector<8x128xf32>
    %c0_12 = arith.constant 0 : index
    %c0_13 = arith.constant 0 : index
    %15 = vector.load %arg6[%c0_12, %c0_13] : memref<128x128xf32, #tpu.memory_space<vmem>>, vector<128x128xf32>
    %cst_14 = arith.constant dense<0.000000e+00> : vector<8x128xf32>
    %16 = tpu.matmul %14, %15, %cst_14 {dimension_numbers = #tpu.dot_dimension_numbers<[1], [0], [0], [1], [0, 0, 1, 1], [], []>} : vector<8x128xf32>, vector<128x128xf32>, vector<8x128xf32> -> vector<8x128xf32>
    %c0_15 = arith.constant 0 : index
    %c0_16 = arith.constant 0 : index
    %17 = vector.load %arg7[%c0_15, %c0_16] : memref<1x128xf32, #tpu.memory_space<vmem>>, vector<1x128xf32>
    %18 = vector.broadcast %17 : vector<1x128xf32> to vector<8x128xf32>
    %19 = arith.addf %16, %18 : vector<8x128xf32>
    %cst_17 = arith.constant 0.000000e+00 : f32
    %20 = vector.broadcast %cst_17 : f32 to vector<8x128xf32>
    %21 = arith.maximumf %19, %20 : vector<8x128xf32>
    %c0_18 = arith.constant 0 : index
    %c0_19 = arith.constant 0 : index
    %22 = vector.load %arg8[%c0_18, %c0_19] : memref<1x128xf32, #tpu.memory_space<vmem>>, vector<1x128xf32>
    "tpu.trace_start"() <{level = 10 : i32, message = "ok,bk->ob"}> : () -> ()
    %cst_20 = arith.constant dense<0.000000e+00> : vector<1x8xf32>
    %23 = tpu.matmul %22, %21, %cst_20 {dimension_numbers = #tpu.dot_dimension_numbers<[1], [1], [0], [0], [0, 0, 1, 0], [], []>} : vector<1x128xf32>, vector<8x128xf32>, vector<1x8xf32> -> vector<1x8xf32>
    "tpu.trace_stop"() : () -> ()
    %c0_21 = arith.constant 0 : index
    %c0_22 = arith.constant 0 : index
    %24 = vector.load %arg9[%c0_21, %c0_22] : memref<1x1xf32, #tpu.memory_space<vmem>>, vector<1x1xf32>
    %25 = vector.broadcast %24 : vector<1x1xf32> to vector<1x8xf32>
    %26 = arith.addf %23, %25 : vector<1x8xf32>
    %27 = vector.shape_cast %26 : vector<1x8xf32> to vector<1x1x8xf32>
    %c0_23 = arith.constant 0 : index
    %c0_24 = arith.constant 0 : index
    %c0_25 = arith.constant 0 : index
    %28 = vector.load %arg10[%c0_23, %c0_24, %c0_25] : memref<1x1x8xf32, #tpu.memory_space<vmem>>, vector<1x1x8xf32>
    tpu.vector_store %arg10[%c0_23, %c0_24, %c0_25], %27 {strides = array<i32>} : memref<1x1x8xf32, #tpu.memory_space<vmem>>, vector<1x1x8xf32>,
    return
  }
  func.func @transform_0(%arg0: i32) -> (i32, i32) {
    %c0_i32 = arith.constant 0 : i32
    %c0_i32_0 = arith.constant 0 : i32
    return %arg0, %c0_i32 : i32, i32
  }
  func.func @transform_1(%arg0: i32) -> (i32, i32) {
    %c0_i32 = arith.constant 0 : i32
    %c0_i32_0 = arith.constant 0 : i32
    %c0_i32_1 = arith.constant 0 : i32
    return %c0_i32, %c0_i32_0 : i32, i32
  }
  func.func @transform_2(%arg0: i32) -> (i32, i32) {
    %c0_i32 = arith.constant 0 : i32
    %c0_i32_0 = arith.constant 0 : i32
    %c0_i32_1 = arith.constant 0 : i32
    return %c0_i32, %c0_i32_0 : i32, i32
  }
  func.func @transform_3(%arg0: i32) -> (i32, i32) {
    %c0_i32 = arith.constant 0 : i32
    %c0_i32_0 = arith.constant 0 : i32
    %c0_i32_1 = arith.constant 0 : i32
    return %c0_i32, %c0_i32_0 : i32, i32
  }
  func.func @transform_4(%arg0: i32) -> (i32, i32) {
    %c0_i32 = arith.constant 0 : i32
    %c0_i32_0 = arith.constant 0 : i32
    %c0_i32_1 = arith.constant 0 : i32
    return %c0_i32, %c0_i32_0 : i32, i32
  }
  func.func @transform_5(%arg0: i32) -> (i32, i32) {
    %c0_i32 = arith.constant 0 : i32
    %c0_i32_0 = arith.constant 0 : i32
    %c0_i32_1 = arith.constant 0 : i32
    return %c0_i32, %c0_i32_0 : i32, i32
  }
  func.func @transform_6(%arg0: i32) -> (i32, i32) {
    %c0_i32 = arith.constant 0 : i32
    %c0_i32_0 = arith.constant 0 : i32
    %c0_i32_1 = arith.constant 0 : i32
    return %c0_i32, %c0_i32_0 : i32, i32
  }
  func.func @transform_7(%arg0: i32) -> (i32, i32) {
    %c0_i32 = arith.constant 0 : i32
    %c0_i32_0 = arith.constant 0 : i32
    %c0_i32_1 = arith.constant 0 : i32
    return %c0_i32, %c0_i32_0 : i32, i32
  }
  func.func @transform_8(%arg0: i32) -> (i32, i32) {
    %c0_i32 = arith.constant 0 : i32
    %c0_i32_0 = arith.constant 0 : i32
    %c0_i32_1 = arith.constant 0 : i32
    return %c0_i32, %c0_i32_0 : i32, i32
  }
  func.func @transform_9(%arg0: i32) -> (i32, i32, i32) {
    %c0_i32 = arith.constant 0 : i32
    %c0_i32_0 = arith.constant 0 : i32
    %c0_i32_1 = arith.constant 0 : i32
    return %arg0, %c0_i32, %c0_i32_0 : i32, i32, i32
  }
}

</mosaic_0001>

<llo_original>
// kernel: tpu_custom_call.1
$region0: #{tpu_custom_call.1}
  #allocation0 [shape = 'u32[]', space=smem, size = 0x4, offset = 0x4, fixed_abs, tag = 'smem constant byte address 0x4 - core index']
  #allocation1 [shape = 'u32[144,128]{1,0:T(1,128)}', space=vmem, size = 0x12000, scoped, tag = 'internal scratch']
  #allocation2 [shape = 'f32[1,1]{1,0:T(1,128)S(1)}', space=vmem, size = 0x200, scoped, tag = 'scoped memory for tpu_custom_call.1']
  %s0 = inlined_call_operand.hbm [shape: f32[16,15], index: 0, kind: input, shape index: {}]
  %s1 = inlined_call_operand.hbm [shape: f32[15,128], index: 1, kind: input, shape index: {}]
  %s2 = inlined_call_operand.vmem [shape: f32[1,128], index: 2, kind: input, shape index: {}]
  %s3 = inlined_call_operand.hbm [shape: f32[128,128], index: 3, kind: input, shape index: {}]
  %s4 = inlined_call_operand.vmem [shape: f32[1,128], index: 4, kind: input, shape index: {}]
  %s5 = inlined_call_operand.hbm [shape: f32[128,128], index: 5, kind: input, shape index: {}]
  %s6 = inlined_call_operand.vmem [shape: f32[1,128], index: 6, kind: input, shape index: {}]
  %s7 = inlined_call_operand.vmem [shape: f32[1,128], index: 7, kind: input, shape index: {}]
  %s8 = inlined_call_operand.<no memory space> [shape: f32[1,1], index: 8, kind: input, shape index: {}]
  %s9 = inlined_call_operand.hbm [shape: f32[2,1,8], index: 9, kind: output, shape index: {}]
  %s10 = sld [smem:[#allocation0]]
  $region85: #{tpu_custom_call.1} parent=0
    _
  %s12 = ssub.s32 1, %s10
  %s13 = scalar_select 0, %s12, %s10
  %v14 = vstv %s8
  %15 = vst [vmem:[#allocation2] sm:$0x1] %v14
  $region1: #{tpu_custom_call.1} parent=0
    #allocation3 [shape = 'u8[8192]{0}', space=vmem, size = 0x2000, scoped, tag = 'input window, operand 0']
    #allocation4 [shape = 's32[2]{0}', space=sflag, size = 0x8, scoped, tag = 'scoped memory for tpu_custom_call.1']
    #allocation5 [shape = 's32[2]{0}', space=sflag, size = 0x8, scoped, tag = 'scoped memory for tpu_custom_call.1']
    #allocation6 [shape = 'u8[8192]{0}', space=vmem, size = 0x2000, scoped, tag = 'input window, operand 1, single buffered']
    #allocation7 [shape = 's32[1]{0}', space=sflag, size = 0x4, scoped, tag = 'scoped memory for tpu_custom_call.1']
    #allocation8 [shape = 'u8[65536]{0}', space=vmem, size = 0x10000, scoped, tag = 'input window, operand 3, single buffered']
    #allocation9 [shape = 'u8[65536]{0}', space=vmem, size = 0x10000, scoped, tag = 'input window, operand 5, single buffered']
    #allocation10 [shape = 's32[1]{0}', space=sflag, size = 0x4, scoped, tag = 'scoped memory for tpu_custom_call.1']
    #allocation11 [shape = 'u8[1024]{0}', space=vmem, size = 0x400, scoped, tag = 'output window, operand 0']
    %16 = vsyncpa [#allocation4], 0
    %s17 = scalar_lea.sflag [#allocation4], 1
    %18 = vsyncpa %s17, 0
    %19 = vsyncpa [#allocation7], 0
    %20 = vsyncpa [#allocation10], 0
    %21 = vsyncpa [#allocation5], 0
    %s22 = scalar_lea.sflag [#allocation5], 1
    %23 = vsyncpa %s22, 0
    loop: start=0, step=1, limit=4
    $region2: #{tpu_custom_call.1} parent=1 // loop_pre_header
      _
    $region3: #{tpu_custom_call.1} parent=1 // loop_header
      %s25 = sphi 0, %s29
      %p26 = scmp.ge.s32.totalorder %s25, 4
      %s35 = sphi 0, %s37
      %s38 = sphi 0, %s35
      %s39 = sphi 0, %s38
      %s55 = sphi 0, %s39
      %s59 = sphi 0, %s59
      %s61 = sphi 0, %s59
      %s62 = sphi 0, %s61
      %s76 = sphi 0, %s62
      %s80 = sphi 0, %s80
      %s82 = sphi 0, %s80
      %s83 = sphi 0, %s82
      %s97 = sphi 0, %s83
      %s101 = sphi 0, %s101
      %s103 = sphi 0, %s101
      %s104 = sphi 0, %s103
      %s118 = sphi 0, %s104
      %s122 = sphi 0, %s122
      %s124 = sphi 0, %s122
      %s125 = sphi 0, %s124
      %s139 = sphi 0, %s125
      %s143 = sphi 0, %s143
      %s145 = sphi 0, %s143
      %s146 = sphi 0, %s145
      %s160 = sphi 0, %s146
      %s164 = sphi 0, %s164
      %s166 = sphi 0, %s164
      %s167 = sphi 0, %s166
      %s181 = sphi 0, %s167
      %s185 = sphi 0, %s185
      %s187 = sphi 0, %s185
      %s188 = sphi 0, %s187
      %s202 = sphi 0, %s188
      %s206 = sphi 0, %s206
      %s208 = sphi 0, %s206
      %s209 = sphi 0, %s208
      %s223 = sphi 0, %s209
      %s229 = sphi 0, %s231
      %s232 = sphi 0, %s229
      %s233 = sphi 0, %s232
      %s249 = sphi 0, %s233
    $region4: #{tpu_custom_call.1} parent=1 // loop_header_branch
      %28 = sbr.rel (%p26) target = $region8
    $region5: #{tpu_custom_call.1} parent=1 // loop_body
      %s30 = ssub.s32 %s25, 1
      %s31 = ssub.s32 %s25, 2
      %s32 = sadd.s32 %s25, 1
      %s33 = ssub.s32 %s25, %s32
      %p34 = scmp.eq.s32.totalorder %s33, 0
      %s36 = sadd.s32 %s35, 1
      %s37 = scalar_select %p34, %s35, %s36
      %p40 = pneg %p34
      %p41 = scmp.eq.s32.totalorder %s25, 1
      %p42 = por %p40, %p41
      %p43 = scmp.ne.s32.totalorder %s35, %s38
      %p44 = scmp.eq.s32.totalorder %s25, 0
      %p45 = por %p43, %p44
      %p46 = scmp.ne.s32.totalorder %s35, %s38
      %p47 = scmp.eq.s32.totalorder %s30, 1
      %p48 = por %p46, %p47
      %p49 = scmp.ne.s32.totalorder %s38, %s39
      %p50 = scmp.eq.s32.totalorder %s30, 0
      %p51 = por %p49, %p50
      %p52 = scmp.ne.s32.totalorder %s38, %s39
      %p53 = scmp.eq.s32.totalorder %s31, 1
      %p54 = por %p52, %p53
      %p56 = scmp.ne.s32.totalorder %s39, %s55
      %p57 = scmp.eq.s32.totalorder %s31, 0
      %p58 = por %p56, %p57
      %s60 = sadd.s32 %s59, 1
      %p63 = scmp.eq.s32.totalorder %s25, 1
      %p64 = scmp.ne.s32.totalorder %s59, %s61
      %p65 = scmp.eq.s32.totalorder %s25, 0
      %p66 = por %p64, %p65
      %p67 = scmp.ne.s32.totalorder %s59, %s61
      %p68 = scmp.eq.s32.totalorder %s30, 1
      %p69 = por %p67, %p68
      %p70 = scmp.ne.s32.totalorder %s61, %s62
      %p71 = scmp.eq.s32.totalorder %s30, 0
      %p72 = por %p70, %p71
      %p73 = scmp.ne.s32.totalorder %s61, %s62
      %p74 = scmp.eq.s32.totalorder %s31, 1
      %p75 = por %p73, %p74
      %p77 = scmp.ne.s32.totalorder %s62, %s76
      %p78 = scmp.eq.s32.totalorder %s31, 0
      %p79 = por %p77, %p78
      %s81 = sadd.s32 %s80, 1
      %p84 = scmp.eq.s32.totalorder %s25, 1
      %p85 = scmp.ne.s32.totalorder %s80, %s82
      %p86 = scmp.eq.s32.totalorder %s25, 0
      %p87 = por %p85, %p86
      %p88 = scmp.ne.s32.totalorder %s80, %s82
      %p89 = scmp.eq.s32.totalorder %s30, 1
      %p90 = por %p88, %p89
      %p91 = scmp.ne.s32.totalorder %s82, %s83
      %p92 = scmp.eq.s32.totalorder %s30, 0
      %p93 = por %p91, %p92
      %p94 = scmp.ne.s32.totalorder %s82, %s83
      %p95 = scmp.eq.s32.totalorder %s31, 1
      %p96 = por %p94, %p95
      %p98 = scmp.ne.s32.totalorder %s83, %s97
      %p99 = scmp.eq.s32.totalorder %s31, 0
      %p100 = por %p98, %p99
      %s102 = sadd.s32 %s101, 1
      %p105 = scmp.eq.s32.totalorder %s25, 1
      %p106 = scmp.ne.s32.totalorder %s101, %s103
      %p107 = scmp.eq.s32.totalorder %s25, 0
      %p108 = por %p106, %p107
      %p109 = scmp.ne.s32.totalorder %s101, %s103
      %p110 = scmp.eq.s32.totalorder %s30, 1
      %p111 = por %p109, %p110
      %p112 = scmp.ne.s32.totalorder %s103, %s104
      %p113 = scmp.eq.s32.totalorder %s30, 0
      %p114 = por %p112, %p113
      %p115 = scmp.ne.s32.totalorder %s103, %s104
      %p116 = scmp.eq.s32.totalorder %s31, 1
      %p117 = por %p115, %p116
      %p119 = scmp.ne.s32.totalorder %s104, %s118
      %p120 = scmp.eq.s32.totalorder %s31, 0
      %p121 = por %p119, %p120
      %s123 = sadd.s32 %s122, 1
      %p126 = scmp.eq.s32.totalorder %s25, 1
      %p127 = scmp.ne.s32.totalorder %s122, %s124
      %p128 = scmp.eq.s32.totalorder %s25, 0
      %p129 = por %p127, %p128
      %p130 = scmp.ne.s32.totalorder %s122, %s124
      %p131 = scmp.eq.s32.totalorder %s30, 1
      %p132 = por %p130, %p131
      %p133 = scmp.ne.s32.totalorder %s124, %s125
      %p134 = scmp.eq.s32.totalorder %s30, 0
      %p135 = por %p133, %p134
      %p136 = scmp.ne.s32.totalorder %s124, %s125
      %p137 = scmp.eq.s32.totalorder %s31, 1
      %p138 = por %p136, %p137
      %p140 = scmp.ne.s32.totalorder %s125, %s139
      %p141 = scmp.eq.s32.totalorder %s31, 0
      %p142 = por %p140, %p141
      %s144 = sadd.s32 %s143, 1
      %p147 = scmp.eq.s32.totalorder %s25, 1
      %p148 = scmp.ne.s32.totalorder %s143, %s145
      %p149 = scmp.eq.s32.totalorder %s25, 0
      %p150 = por %p148, %p149
      %p151 = scmp.ne.s32.totalorder %s143, %s145
      %p152 = scmp.eq.s32.totalorder %s30, 1
      %p153 = por %p151, %p152
      %p154 = scmp.ne.s32.totalorder %s145, %s146
      %p155 = scmp.eq.s32.totalorder %s30, 0
      %p156 = por %p154, %p155
      %p157 = scmp.ne.s32.totalorder %s145, %s146
      %p158 = scmp.eq.s32.totalorder %s31, 1
      %p159 = por %p157, %p158
      %p161 = scmp.ne.s32.totalorder %s146, %s160
      %p162 = scmp.eq.s32.totalorder %s31, 0
      %p163 = por %p161, %p162
      %s165 = sadd.s32 %s164, 1
      %p168 = scmp.eq.s32.totalorder %s25, 1
      %p169 = scmp.ne.s32.totalorder %s164, %s166
      %p170 = scmp.eq.s32.totalorder %s25, 0
      %p171 = por %p169, %p170
      %p172 = scmp.ne.s32.totalorder %s164, %s166
      %p173 = scmp.eq.s32.totalorder %s30, 1
      %p174 = por %p172, %p173
      %p175 = scmp.ne.s32.totalorder %s166, %s167
      %p176 = scmp.eq.s32.totalorder %s30, 0
      %p177 = por %p175, %p176
      %p178 = scmp.ne.s32.totalorder %s166, %s167
      %p179 = scmp.eq.s32.totalorder %s31, 1
      %p180 = por %p178, %p179
      %p182 = scmp.ne.s32.totalorder %s167, %s181
      %p183 = scmp.eq.s32.totalorder %s31, 0
      %p184 = por %p182, %p183
      %s186 = sadd.s32 %s185, 1
      %p189 = scmp.eq.s32.totalorder %s25, 1
      %p190 = scmp.ne.s32.totalorder %s185, %s187
      %p191 = scmp.eq.s32.totalorder %s25, 0
      %p192 = por %p190, %p191
      %p193 = scmp.ne.s32.totalorder %s185, %s187
      %p194 = scmp.eq.s32.totalorder %s30, 1
      %p195 = por %p193, %p194
      %p196 = scmp.ne.s32.totalorder %s187, %s188
      %p197 = scmp.eq.s32.totalorder %s30, 0
      %p198 = por %p196, %p197
      %p199 = scmp.ne.s32.totalorder %s187, %s188
      %p200 = scmp.eq.s32.totalorder %s31, 1
      %p201 = por %p199, %p200
      %p203 = scmp.ne.s32.totalorder %s188, %s202
      %p204 = scmp.eq.s32.totalorder %s31, 0
      %p205 = por %p203, %p204
      %s207 = sadd.s32 %s206, 1
      %p210 = scmp.eq.s32.totalorder %s25, 1
      %p211 = scmp.ne.s32.totalorder %s206, %s208
      %p212 = scmp.eq.s32.totalorder %s25, 0
      %p213 = por %p211, %p212
      %p214 = scmp.ne.s32.totalorder %s206, %s208
      %p215 = scmp.eq.s32.totalorder %s30, 1
      %p216 = por %p214, %p215
      %p217 = scmp.ne.s32.totalorder %s208, %s209
      %p218 = scmp.eq.s32.totalorder %s30, 0
      %p219 = por %p217, %p218
      %p220 = scmp.ne.s32.totalorder %s208, %s209
      %p221 = scmp.eq.s32.totalorder %s31, 1
      %p222 = por %p220, %p221
      %p224 = scmp.ne.s32.totalorder %s209, %s223
      %p225 = scmp.eq.s32.totalorder %s31, 0
      %p226 = por %p224, %p225
      %s227 = ssub.s32 %s25, %s32
      %p228 = scmp.eq.s32.totalorder %s227, 0
      %s230 = sadd.s32 %s229, 1
      %s231 = scalar_select %p228, %s229, %s230
      %p234 = pneg %p228
      %p235 = scmp.eq.s32.totalorder %s25, 1
      %p236 = por %p234, %p235
      %p237 = scmp.ne.s32.totalorder %s229, %s232
      %p238 = scmp.eq.s32.totalorder %s25, 0
      %p239 = por %p237, %p238
      %p240 = scmp.ne.s32.totalorder %s229, %s232
      %p241 = scmp.eq.s32.totalorder %s30, 1
      %p242 = por %p240, %p241
      %p243 = scmp.ne.s32.totalorder %s232, %s233
      %p244 = scmp.eq.s32.totalorder %s30, 0
      %p245 = por %p243, %p244
      %p246 = scmp.ne.s32.totalorder %s232, %s233
      %p247 = scmp.eq.s32.totalorder %s31, 1
      %p248 = por %p246, %p247
      %p250 = scmp.ne.s32.totalorder %s233, %s249
      %p251 = scmp.eq.s32.totalorder %s31, 0
      %p252 = por %p250, %p251
      %p253 = scmp.le.s32.totalorder 1, %s25
      %p254 = scmp.lt.s32.totalorder %s25, 3
      %p255 = pnand %p253, %p254
      %p256 = pneg %p255
      // Predicated region
      $region9: #{tpu_custom_call.1} parent=5 // pred_check
        _
      $region10: #{tpu_custom_call.1} parent=5 // pred_check_branch
        %258 = sbr.rel (%p255) target = $region12
      $region11: #{tpu_custom_call.1} parent=5 // pred_region
        %s259 = ssub.s32 %s25, 1
        // Predicated region
        $region13: #{tpu_custom_call.1} parent=11 // pred_check
          %p260 = pneg %p72
        $region14: #{tpu_custom_call.1} parent=11 // pred_check_branch
          %262 = sbr.rel (%p260) target = $region16
        $region15: #{tpu_custom_call.1} parent=11 // pred_region
          %s264 = ssub.s32 256, 256
          %265 = vsyncadd [#allocation7], %s264
          %s266 = sshll.u32 [#allocation6], 4
          %s267 = int_to_ptr.vmem [resolvable:$true] %s266
          %272 = dma.hbm_to_vmem [thread:$0]  %s1, 256, %s267, [#allocation7], 128, 128, 8
        $region16: #{tpu_custom_call.1} parent=11 // pred_fallthru
          _
        // Predicated region
        $region17: #{tpu_custom_call.1} parent=11 // pred_check
          %p273 = pneg %p93
        $region18: #{tpu_custom_call.1} parent=11 // pred_check_branch
          %275 = sbr.rel (%p273) target = $region20
        $region19: #{tpu_custom_call.1} parent=11 // pred_region
          _
        $region20: #{tpu_custom_call.1} parent=11 // pred_fallthru
          _
        // Predicated region
        $region21: #{tpu_custom_call.1} parent=11 // pred_check
          %p276 = pneg %p114
        $region22: #{tpu_custom_call.1} parent=11 // pred_check_branch
          %278 = sbr.rel (%p276) target = $region24
        $region23: #{tpu_custom_call.1} parent=11 // pred_region
          %s280 = ssub.s32 2048, 2048
          %281 = vsyncadd [#allocation7], %s280
          %s282 = sshll.u32 [#allocation8], 4
          %s283 = int_to_ptr.vmem [resolvable:$true] %s282
          %288 = dma.hbm_to_vmem [thread:$0]  %s3, 2048, %s283, [#allocation7], 128, 128, 8
        $region24: #{tpu_custom_call.1} parent=11 // pred_fallthru
          _
        // Predicated region
        $region25: #{tpu_custom_call.1} parent=11 // pred_check
          %p289 = pneg %p135
        $region26: #{tpu_custom_call.1} parent=11 // pred_check_branch
          %291 = sbr.rel (%p289) target = $region28
        $region27: #{tpu_custom_call.1} parent=11 // pred_region
          _
        $region28: #{tpu_custom_call.1} parent=11 // pred_fallthru
          _
        // Predicated region
        $region29: #{tpu_custom_call.1} parent=11 // pred_check
          %p292 = pneg %p156
        $region30: #{tpu_custom_call.1} parent=11 // pred_check_branch
          %294 = sbr.rel (%p292) target = $region32
        $region31: #{tpu_custom_call.1} parent=11 // pred_region
          %s296 = ssub.s32 2048, 2048
          %297 = vsyncadd [#allocation10], %s296
          %s298 = sshll.u32 [#allocation9], 4
          %s299 = int_to_ptr.vmem [resolvable:$true] %s298
          %304 = dma.hbm_to_vmem [thread:$0]  %s5, 2048, %s299, [#allocation10], 128, 128, 8
        $region32: #{tpu_custom_call.1} parent=11 // pred_fallthru
          _
        // Predicated region
        $region33: #{tpu_custom_call.1} parent=11 // pred_check
          %p305 = pneg %p177
        $region34: #{tpu_custom_call.1} parent=11 // pred_check_branch
          %307 = sbr.rel (%p305) target = $region36
        $region35: #{tpu_custom_call.1} parent=11 // pred_region
          _
        $region36: #{tpu_custom_call.1} parent=11 // pred_fallthru
          _
        // Predicated region
        $region37: #{tpu_custom_call.1} parent=11 // pred_check
          %p308 = pneg %p198
        $region38: #{tpu_custom_call.1} parent=11 // pred_check_branch
          %310 = sbr.rel (%p308) target = $region40
        $region39: #{tpu_custom_call.1} parent=11 // pred_region
          _
        $region40: #{tpu_custom_call.1} parent=11 // pred_fallthru
          _
        // Predicated region
        $region41: #{tpu_custom_call.1} parent=11 // pred_check
          %p311 = pneg %p219
        $region42: #{tpu_custom_call.1} parent=11 // pred_check_branch
          %313 = sbr.rel (%p311) target = $region44
        $region43: #{tpu_custom_call.1} parent=11 // pred_region
          _
        $region44: #{tpu_custom_call.1} parent=11 // pred_fallthru
          _
      $region12: #{tpu_custom_call.1} parent=5 // pred_fallthru
        _
      %p314 = scmp.lt.s32.totalorder %s25, 2
      // Predicated region
      $region45: #{tpu_custom_call.1} parent=5 // pred_check
        %p315 = pneg %p314
      $region46: #{tpu_custom_call.1} parent=5 // pred_check_branch
        %317 = sbr.rel (%p315) target = $region48
      $region47: #{tpu_custom_call.1} parent=5 // pred_region
        // Predicated region
        $region49: #{tpu_custom_call.1} parent=47 // pred_check
          %p318 = pneg %p45
        $region50: #{tpu_custom_call.1} parent=47 // pred_check_branch
          %320 = sbr.rel (%p318) target = $region52
        $region51: #{tpu_custom_call.1} parent=47 // pred_region
          %s321 = sand.u32 %s35, 1
          %s322 = scalar_lea.sflag [#allocation4], %s321
          %s323 = sand.u32 %s35, 1
          %s324 = smul.addr %s323, 8
          %s325 = scalar_lea.vmem [#allocation3], %s324
          %s327 = ssub.s32 128, 128
          %328 = vsyncadd %s322, %s327
          %s329 = smul.addr %s25, 128
          %s330 = scalar_lea.hbm %s0, %s329
          %s332 = sshll.u32 %s325, 4
          %s333 = int_to_ptr.vmem [resolvable:$true] %s332
          %335 = dma.hbm_to_vmem [thread:$0]  %s330, 128, %s333, %s322
        $region52: #{tpu_custom_call.1} parent=47 // pred_fallthru
          _
      $region48: #{tpu_custom_call.1} parent=5 // pred_fallthru
        _
      %p336 = scmp.le.s32.totalorder 1, %s25
      %p337 = scmp.lt.s32.totalorder %s25, 3
      %p338 = pnand %p336, %p337
      %p339 = pneg %p338
      // Predicated region
      $region53: #{tpu_custom_call.1} parent=5 // pred_check
        _
      $region54: #{tpu_custom_call.1} parent=5 // pred_check_branch
        %341 = sbr.rel (%p338) target = $region56
      $region55: #{tpu_custom_call.1} parent=5 // pred_region
        %s342 = ssub.s32 %s25, 1
        %s343 = sand.u32 %s38, 1
        %s344 = scalar_lea.sflag [#allocation4], %s343
        %s345 = sand.u32 %s38, 1
        %s346 = smul.addr %s345, 8
        %s347 = scalar_lea.vmem [#allocation3], %s346
        // Predicated region
        $region57: #{tpu_custom_call.1} parent=55 // pred_check
          %p348 = pneg %p51
        $region58: #{tpu_custom_call.1} parent=55 // pred_check_branch
          %350 = sbr.rel (%p348) target = $region60
        $region59: #{tpu_custom_call.1} parent=55 // pred_region
          %351 = dma.done %s344, 128
        $region60: #{tpu_custom_call.1} parent=55 // pred_fallthru
          _
        // Predicated region
        $region61: #{tpu_custom_call.1} parent=55 // pred_check
          %p352 = pneg %p72
        $region62: #{tpu_custom_call.1} parent=55 // pred_check_branch
          %354 = sbr.rel (%p352) target = $region64
        $region63: #{tpu_custom_call.1} parent=55 // pred_region
          %355 = dma.done [#allocation7], 256
        $region64: #{tpu_custom_call.1} parent=55 // pred_fallthru
          _
        // Predicated region
        $region65: #{tpu_custom_call.1} parent=55 // pred_check
          %p356 = pneg %p114
        $region66: #{tpu_custom_call.1} parent=55 // pred_check_branch
          %358 = sbr.rel (%p356) target = $region68
        $region67: #{tpu_custom_call.1} parent=55 // pred_region
          %359 = dma.done [#allocation7], 2048
        $region68: #{tpu_custom_call.1} parent=55 // pred_fallthru
          _
        // Predicated region
        $region69: #{tpu_custom_call.1} parent=55 // pred_check
          %p360 = pneg %p156
        $region70: #{tpu_custom_call.1} parent=55 // pred_check_branch
          %362 = sbr.rel (%p360) target = $region72
        $region71: #{tpu_custom_call.1} parent=55 // pred_region
          %363 = dma.done [#allocation10], 2048
        $region72: #{tpu_custom_call.1} parent=55 // pred_fallthru
          _
        %s364 = sand.u32 %s38, 1
        %s365 = scalar_lea.sflag [#allocation4], %s364
        %s366 = sand.u32 %s38, 1
        %s367 = smul.addr %s366, 8
        %s368 = scalar_lea.vmem [#allocation3], %s367
        %p369 = pneg %p51
        %p370 = pneg %p48
        %p371 = pneg %p72
        %p372 = pneg %p69
        %p373 = pneg %p93
        %p374 = pneg %p90
        %p375 = pneg %p114
        %p376 = pneg %p111
        %p377 = pneg %p135
        %p378 = pneg %p132
        %p379 = pneg %p156
        %p380 = pneg %p153
        %p381 = pneg %p177
        %p382 = pneg %p174
        %p383 = pneg %p198
        %p384 = pneg %p195
        %p385 = pneg %p219
        %p386 = pneg %p216
        %p387 = pneg %p245
        %p388 = pneg %p242
        %s389 = sand.u32 %s232, 1
        %s390 = scalar_lea.sflag [#allocation5], %s389
        %s391 = sand.u32 %s232, 1
        %s392 = scalar_lea.vmem [#allocation11], %s391
        %v393 = vld [vmem:[%s347] sm:$0xff]
        %v394 = vld [vmem:[#allocation6] sm:$0xff]
        %v395 = vld [vmem:[#allocation6 + $0x8] sm:$0x7f]
        %v396 = vld [vmem:[%s2] sm:$0x1]
        %v398 = vlaneseq
        %v399 = vshrl.u32 %v398, 7
        %v400 = vsub.s32 0, %v399
        %v401 = vrot.slane %v396, %v400
        %vm403 = vcmask 121856
        %v405 = vsel %vm403, %v393, 0
        %vm407 = vcmask 1046528
        %v409 = vsel %vm407, %v395, 0
        %411 = vmatprep.subr.mxu0 0.0
        %412 = vmatpush1.msra.mxu0 %v394
        %413 = vmatprep.subr.mxu0 0.0
        %414 = vmatpush1.msra.mxu0 %v409
        %415 = vmatprep.subr.mxu0 0.0
        %416 = vmatpush1.msra.mxu0 0.0
        %417 = vmatprep.subr.mxu0 0.0
        %418 = vmatpush1.msra.mxu0 0.0
        %419 = vmatprep.subr.mxu0 0.0
        %420 = vmatpush1.msra.mxu0 0.0
        %421 = vmatprep.subr.mxu0 0.0
        %422 = vmatpush1.msra.mxu0 0.0
        %423 = vmatprep.subr.mxu0 0.0
        %424 = vmatpush1.msra.mxu0 0.0
        %425 = vmatprep.subr.mxu0 0.0
        %426 = vmatpush1.msra.mxu0 0.0
        %427 = vmatprep.subr.mxu0 0.0
        %428 = vmatpush1.msra.mxu0 0.0
        %429 = vmatprep.subr.mxu0 0.0
        %430 = vmatpush1.msra.mxu0 0.0
        %431 = vmatprep.subr.mxu0 0.0
        %432 = vmatpush1.msra.mxu0 0.0
        %433 = vmatprep.subr.mxu0 0.0
        %434 = vmatpush1.msra.mxu0 0.0
        %435 = vmatprep.subr.mxu0 0.0
        %436 = vmatpush1.msra.mxu0 0.0
        %437 = vmatprep.subr.mxu0 0.0
        %438 = vmatpush1.msra.mxu0 0.0
        %439 = vmatprep.subr.mxu0 0.0
        %440 = vmatpush1.msra.mxu0 0.0
        %441 = vmatprep.subr.mxu0 0.0
        %442 = vmatpush1.msra.mxu0 0.0
        %443 = vmatprep.subr.mxu0 0.0
        %444 = vmatpush1.msra.mxu0 0.0
        %445 = vmatprep.subr.mxu0 0.0
        %446 = vmatpush1.msra.mxu0 0.0
        %447 = vmatprep.subr.mxu0 0.0
        %448 = vmatpush1.msra.mxu0 0.0
        %449 = vmatprep.subr.mxu0 0.0
        %450 = vmatpush1.msra.mxu0 0.0
        %451 = vmatprep.subr.mxu0 0.0
        %452 = vmatpush1.msra.mxu0 0.0
        %453 = vmatprep.subr.mxu0 0.0
        %454 = vmatpush1.msra.mxu0 0.0
        %455 = vmatprep.subr.mxu0 0.0
        %456 = vmatpush1.msra.mxu0 0.0
        %457 = vmatprep.subr.mxu0 0.0
        %458 = vmatpush1.msra.mxu0 0.0
        %459 = vmatprep.subr.mxu0 0.0
        %460 = vmatpush1.msra.mxu0 0.0
        %461 = vmatprep.subr.mxu0 0.0
        %462 = vmatpush1.msra.mxu0 0.0
        %463 = vmatprep.subr.mxu0 0.0
        %464 = vmatpush1.msra.mxu0 0.0
        %465 = vmatprep.subr.mxu0 0.0
        %466 = vmatpush1.msra.mxu0 0.0
        %467 = vmatprep.subr.mxu0 0.0
        %468 = vmatpush1.msra.mxu0 0.0
        %469 = vmatprep.subr.mxu0 0.0
        %470 = vmatpush1.msra.mxu0 0.0
        %471 = vmatprep.subr.mxu0 0.0
        %472 = vmatpush1.msra.mxu0 0.0
        %473 = vmatprep.subr.mxu0 0.0
        %474 = vmatpush1.msra.mxu0 0.0
        %475 = vmatprep.mubr.f32.mxu0 0.0
        %476 = vmatmul.mubr.f32.gmra.mrb[0].mxu0 %v405
        %v477 = vpop.f32.mrb[0].mxu0
        %v478 = vadd.f32 %v401, %v477
        %v479 = vpop.f32.mrb[0].mxu0
        %480 = vdwg.mxu0
        %v481 = vmax.f32 %v478, 0.0
        %v482 = vld [vmem:[#allocation8] sm:$0xff]
        %v483 = vld [vmem:[#allocation8 + $0x8] sm:$0xff]
        %v484 = vld [vmem:[#allocation8 + $0x10] sm:$0xff]
        %v485 = vld [vmem:[#allocation8 + $0x18] sm:$0xff]
        %v486 = vld [vmem:[#allocation8 + $0x20] sm:$0xff]
        %v487 = vld [vmem:[#allocation8 + $0x28] sm:$0xff]
        %v488 = vld [vmem:[#allocation8 + $0x30] sm:$0xff]
        %v489 = vld [vmem:[#allocation8 + $0x38] sm:$0xff]
        %v490 = vld [vmem:[#allocation8 + $0x40] sm:$0xff]
        %v491 = vld [vmem:[#allocation8 + $0x48] sm:$0xff]
        %v492 = vld [vmem:[#allocation8 + $0x50] sm:$0xff]
        %v493 = vld [vmem:[#allocation8 + $0x58] sm:$0xff]
        %v494 = vld [vmem:[#allocation8 + $0x60] sm:$0xff]
        %v495 = vld [vmem:[#allocation8 + $0x68] sm:$0xff]
        %v496 = vld [vmem:[#allocation8 + $0x70] sm:$0xff]
        %v497 = vld [vmem:[#allocation8 + $0x78] sm:$0xff]
        %v498 = vld [vmem:[%s4] sm:$0x1]
        %v500 = vlaneseq
        %v501 = vshrl.u32 %v500, 7
        %v502 = vsub.s32 0, %v501
        %v503 = vrot.slane %v498, %v502
        %505 = vmatprep.subr.mxu0 0.0
        %506 = vmatpush1.msra.mxu0 %v482
        %507 = vmatprep.subr.mxu0 0.0
        %508 = vmatpush1.msra.mxu0 %v483
        %509 = vmatprep.subr.mxu0 0.0
        %510 = vmatpush1.msra.mxu0 %v484
        %511 = vmatprep.subr.mxu0 0.0
        %512 = vmatpush1.msra.mxu0 %v485
        %513 = vmatprep.subr.mxu0 0.0
        %514 = vmatpush1.msra.mxu0 %v486
        %515 = vmatprep.subr.mxu0 0.0
        %516 = vmatpush1.msra.mxu0 %v487
        %517 = vmatprep.subr.mxu0 0.0
        %518 = vmatpush1.msra.mxu0 %v488
        %519 = vmatprep.subr.mxu0 0.0
        %520 = vmatpush1.msra.mxu0 %v489
        %521 = vmatprep.subr.mxu0 0.0
        %522 = vmatpush1.msra.mxu0 %v490
        %523 = vmatprep.subr.mxu0 0.0
        %524 = vmatpush1.msra.mxu0 %v491
        %525 = vmatprep.subr.mxu0 0.0
        %526 = vmatpush1.msra.mxu0 %v492
        %527 = vmatprep.subr.mxu0 0.0
        %528 = vmatpush1.msra.mxu0 %v493
        %529 = vmatprep.subr.mxu0 0.0
        %530 = vmatpush1.msra.mxu0 %v494
        %531 = vmatprep.subr.mxu0 0.0
        %532 = vmatpush1.msra.mxu0 %v495
        %533 = vmatprep.subr.mxu0 0.0
        %534 = vmatpush1.msra.mxu0 %v496
        %535 = vmatprep.subr.mxu0 0.0
        %536 = vmatpush1.msra.mxu0 %v497
        %537 = vmatprep.subr.mxu0 0.0
        %538 = vmatpush1.msra.mxu0 0.0
        %539 = vmatprep.subr.mxu0 0.0
        %540 = vmatpush1.msra.mxu0 0.0
        %541 = vmatprep.subr.mxu0 0.0
        %542 = vmatpush1.msra.mxu0 0.0
        %543 = vmatprep.subr.mxu0 0.0
        %544 = vmatpush1.msra.mxu0 0.0
        %545 = vmatprep.subr.mxu0 0.0
        %546 = vmatpush1.msra.mxu0 0.0
        %547 = vmatprep.subr.mxu0 0.0
        %548 = vmatpush1.msra.mxu0 0.0
        %549 = vmatprep.subr.mxu0 0.0
        %550 = vmatpush1.msra.mxu0 0.0
        %551 = vmatprep.subr.mxu0 0.0
        %552 = vmatpush1.msra.mxu0 0.0
        %553 = vmatprep.subr.mxu0 0.0
        %554 = vmatpush1.msra.mxu0 0.0
        %555 = vmatprep.subr.mxu0 0.0
        %556 = vmatpush1.msra.mxu0 0.0
        %557 = vmatprep.subr.mxu0 0.0
        %558 = vmatpush1.msra.mxu0 0.0
        %559 = vmatprep.subr.mxu0 0.0
        %560 = vmatpush1.msra.mxu0 0.0
        %561 = vmatprep.subr.mxu0 0.0
        %562 = vmatpush1.msra.mxu0 0.0
        %563 = vmatprep.subr.mxu0 0.0
        %564 = vmatpush1.msra.mxu0 0.0
        %565 = vmatprep.subr.mxu0 0.0
        %566 = vmatpush1.msra.mxu0 0.0
        %567 = vmatprep.subr.mxu0 0.0
        %568 = vmatpush1.msra.mxu0 0.0
        %569 = vmatprep.mubr.f32.mxu0 0.0
        %570 = vmatmul.mubr.f32.gmra.mrb[0].mxu0 %v481
        %v571 = vpop.f32.mrb[0].mxu0
        %v572 = vadd.f32 %v503, %v571
        %v573 = vpop.f32.mrb[0].mxu0
        %574 = vdwg.mxu0
        %v575 = vmax.f32 %v572, 0.0
        %v576 = vld [vmem:[#allocation9] sm:$0xff]
        %v577 = vld [vmem:[#allocation9 + $0x8] sm:$0xff]
        %v578 = vld [vmem:[#allocation9 + $0x10] sm:$0xff]
        %v579 = vld [vmem:[#allocation9 + $0x18] sm:$0xff]
        %v580 = vld [vmem:[#allocation9 + $0x20] sm:$0xff]
        %v581 = vld [vmem:[#allocation9 + $0x28] sm:$0xff]
        %v582 = vld [vmem:[#allocation9 + $0x30] sm:$0xff]
        %v583 = vld [vmem:[#allocation9 + $0x38] sm:$0xff]
        %v584 = vld [vmem:[#allocation9 + $0x40] sm:$0xff]
        %v585 = vld [vmem:[#allocation9 + $0x48] sm:$0xff]
        %v586 = vld [vmem:[#allocation9 + $0x50] sm:$0xff]
        %v587 = vld [vmem:[#allocation9 + $0x58] sm:$0xff]
        %v588 = vld [vmem:[#allocation9 + $0x60] sm:$0xff]
        %v589 = vld [vmem:[#allocation9 + $0x68] sm:$0xff]
        %v590 = vld [vmem:[#allocation9 + $0x70] sm:$0xff]
        %v591 = vld [vmem:[#allocation9 + $0x78] sm:$0xff]
        %v592 = vld [vmem:[%s6] sm:$0x1]
        %v594 = vlaneseq
        %v595 = vshrl.u32 %v594, 7
        %v596 = vsub.s32 0, %v595
        %v597 = vrot.slane %v592, %v596
        %599 = vmatprep.subr.mxu0 0.0
        %600 = vmatpush1.msra.mxu0 %v576
        %601 = vmatprep.subr.mxu0 0.0
        %602 = vmatpush1.msra.mxu0 %v577
        %603 = vmatprep.subr.mxu0 0.0
        %604 = vmatpush1.msra.mxu0 %v578
        %605 = vmatprep.subr.mxu0 0.0
        %606 = vmatpush1.msra.mxu0 %v579
        %607 = vmatprep.subr.mxu0 0.0
        %608 = vmatpush1.msra.mxu0 %v580
        %609 = vmatprep.subr.mxu0 0.0
        %610 = vmatpush1.msra.mxu0 %v581
        %611 = vmatprep.subr.mxu0 0.0
        %612 = vmatpush1.msra.mxu0 %v582
        %613 = vmatprep.subr.mxu0 0.0
        %614 = vmatpush1.msra.mxu0 %v583
        %615 = vmatprep.subr.mxu0 0.0
        %616 = vmatpush1.msra.mxu0 %v584
        %617 = vmatprep.subr.mxu0 0.0
        %618 = vmatpush1.msra.mxu0 %v585
        %619 = vmatprep.subr.mxu0 0.0
        %620 = vmatpush1.msra.mxu0 %v586
        %621 = vmatprep.subr.mxu0 0.0
        %622 = vmatpush1.msra.mxu0 %v587
        %623 = vmatprep.subr.mxu0 0.0
        %624 = vmatpush1.msra.mxu0 %v588
        %625 = vmatprep.subr.mxu0 0.0
        %626 = vmatpush1.msra.mxu0 %v589
        %627 = vmatprep.subr.mxu0 0.0
        %628 = vmatpush1.msra.mxu0 %v590
        %629 = vmatprep.subr.mxu0 0.0
        %630 = vmatpush1.msra.mxu0 %v591
        %631 = vmatprep.subr.mxu0 0.0
        %632 = vmatpush1.msra.mxu0 0.0
        %633 = vmatprep.subr.mxu0 0.0
        %634 = vmatpush1.msra.mxu0 0.0
        %635 = vmatprep.subr.mxu0 0.0
        %636 = vmatpush1.msra.mxu0 0.0
        %637 = vmatprep.subr.mxu0 0.0
        %638 = vmatpush1.msra.mxu0 0.0
        %639 = vmatprep.subr.mxu0 0.0
        %640 = vmatpush1.msra.mxu0 0.0
        %641 = vmatprep.subr.mxu0 0.0
        %642 = vmatpush1.msra.mxu0 0.0
        %643 = vmatprep.subr.mxu0 0.0
        %644 = vmatpush1.msra.mxu0 0.0
        %645 = vmatprep.subr.mxu0 0.0
        %646 = vmatpush1.msra.mxu0 0.0
        %647 = vmatprep.subr.mxu0 0.0
        %648 = vmatpush1.msra.mxu0 0.0
        %649 = vmatprep.subr.mxu0 0.0
        %650 = vmatpush1.msra.mxu0 0.0
        %651 = vmatprep.subr.mxu0 0.0
        %652 = vmatpush1.msra.mxu0 0.0
        %653 = vmatprep.subr.mxu0 0.0
        %654 = vmatpush1.msra.mxu0 0.0
        %655 = vmatprep.subr.mxu0 0.0
        %656 = vmatpush1.msra.mxu0 0.0
        %657 = vmatprep.subr.mxu0 0.0
        %658 = vmatpush1.msra.mxu0 0.0
        %659 = vmatprep.subr.mxu0 0.0
        %660 = vmatpush1.msra.mxu0 0.0
        %661 = vmatprep.subr.mxu0 0.0
        %662 = vmatpush1.msra.mxu0 0.0
        %663 = vmatprep.mubr.f32.mxu0 0.0
        %664 = vmatmul.mubr.f32.gmra.mrb[0].mxu0 %v575
        %v665 = vpop.f32.mrb[0].mxu0
        %v666 = vadd.f32 %v597, %v665
        %v667 = vpop.f32.mrb[0].mxu0
        %668 = vdwg.mxu0
        %v669 = vmax.f32 %v666, 0.0
        %v670 = vld [vmem:[%s7] sm:$0x1]
        %v671 = vld [vmem:[#allocation2] sm:$0x1]
        %673 = vset.pattern.permute.xlu0 0
        %674 = vperm.xlu0 %673, %v671
        %v675 = vpop.permute.xlu0 %674
        %v677 = vlaneseq
        %v678 = vshrl.u32 %v677, 7
        %v679 = vsub.s32 0, %v678
        %v680 = vrot.slane %v675, %v679
        %681 = vmatprep.subr.mxu0 0.0
        %682 = vmatpush1.xpose.msra.mxu0 %v669
        %683 = vmatprep.subr.mxu0 0.0
        %684 = vmatpush1.xpose.msra.mxu0 0.0
        %685 = vmatprep.subr.mxu0 0.0
        %686 = vmatpush1.xpose.msra.mxu0 0.0
        %687 = vmatprep.subr.mxu0 0.0
        %688 = vmatpush1.xpose.msra.mxu0 0.0
        %689 = vmatprep.subr.mxu0 0.0
        %690 = vmatpush1.xpose.msra.mxu0 0.0
        %691 = vmatprep.subr.mxu0 0.0
        %692 = vmatpush1.xpose.msra.mxu0 0.0
        %693 = vmatprep.subr.mxu0 0.0
        %694 = vmatpush1.xpose.msra.mxu0 0.0
        %695 = vmatprep.subr.mxu0 0.0
        %696 = vmatpush1.xpose.msra.mxu0 0.0
        %697 = vmatprep.subr.mxu0 0.0
        %698 = vmatpush1.xpose.msra.mxu0 0.0
        %699 = vmatprep.subr.mxu0 0.0
        %700 = vmatpush1.xpose.msra.mxu0 0.0
        %701 = vmatprep.subr.mxu0 0.0
        %702 = vmatpush1.xpose.msra.mxu0 0.0
        %703 = vmatprep.subr.mxu0 0.0
        %704 = vmatpush1.xpose.msra.mxu0 0.0
        %705 = vmatprep.subr.mxu0 0.0
        %706 = vmatpush1.xpose.msra.mxu0 0.0
        %707 = vmatprep.subr.mxu0 0.0
        %708 = vmatpush1.xpose.msra.mxu0 0.0
        %709 = vmatprep.subr.mxu0 0.0
        %710 = vmatpush1.xpose.msra.mxu0 0.0
        %711 = vmatprep.subr.mxu0 0.0
        %712 = vmatpush1.xpose.msra.mxu0 0.0
        %713 = vmatprep.subr.mxu0 0.0
        %714 = vmatpush1.xpose.msra.mxu0 0.0
        %715 = vmatprep.subr.mxu0 0.0
        %716 = vmatpush1.xpose.msra.mxu0 0.0
        %717 = vmatprep.subr.mxu0 0.0
        %718 = vmatpush1.xpose.msra.mxu0 0.0
        %719 = vmatprep.subr.mxu0 0.0
        %720 = vmatpush1.xpose.msra.mxu0 0.0
        %721 = vmatprep.subr.mxu0 0.0
        %722 = vmatpush1.xpose.msra.mxu0 0.0
        %723 = vmatprep.subr.mxu0 0.0
        %724 = vmatpush1.xpose.msra.mxu0 0.0
        %725 = vmatprep.subr.mxu0 0.0
        %726 = vmatpush1.xpose.msra.mxu0 0.0
        %727 = vmatprep.subr.mxu0 0.0
        %728 = vmatpush1.xpose.msra.mxu0 0.0
        %729 = vmatprep.subr.mxu0 0.0
        %730 = vmatpush1.xpose.msra.mxu0 0.0
        %731 = vmatprep.subr.mxu0 0.0
        %732 = vmatpush1.xpose.msra.mxu0 0.0
        %733 = vmatprep.subr.mxu0 0.0
        %734 = vmatpush1.xpose.msra.mxu0 0.0
        %735 = vmatprep.subr.mxu0 0.0
        %736 = vmatpush1.xpose.msra.mxu0 0.0
        %737 = vmatprep.subr.mxu0 0.0
        %738 = vmatpush1.xpose.msra.mxu0 0.0
        %739 = vmatprep.subr.mxu0 0.0
        %740 = vmatpush1.xpose.msra.mxu0 0.0
        %741 = vmatprep.subr.mxu0 0.0
        %742 = vmatpush1.xpose.msra.mxu0 0.0
        %743 = vmatprep.subr.mxu0 0.0
        %744 = vmatpush1.xpose.msra.mxu0 0.0
        %745 = vmatprep.mubr.f32.mxu0 0.0
        %746 = vmatmul.mubr.f32.gmra.mrb[0].mxu0 %v670
        %v747 = vpop.f32.mrb[0].mxu0
        %v748 = vadd.f32 %v680, %v747
        %v749 = vpop.f32.mrb[0].mxu0
        %750 = vdwg.mxu0
        %vm751 = vcmask 57344
        %752 = vst.msk [vmem:[%s392] sm:$0x1] %vm751, %v748
        %s753 = sand.u32 %s232, 1
        %s754 = scalar_lea.sflag [#allocation5], %s753
        %s755 = sand.u32 %s232, 1
        %s756 = scalar_lea.vmem [#allocation11], %s755
        // Predicated region
        $region73: #{tpu_custom_call.1} parent=55 // pred_check
          %p757 = pneg %p242
        $region74: #{tpu_custom_call.1} parent=55 // pred_check_branch
          %759 = sbr.rel (%p757) target = $region76
        $region75: #{tpu_custom_call.1} parent=55 // pred_region
          %s761 = ssub.s32 16, 16
          %762 = vsyncadd %s754, %s761
          %s763 = smul.addr %s30, 16
          %s764 = scalar_lea.hbm %s9, %s763
          %s766 = sshll.u32 %s756, 4
          %s767 = int_to_ptr.vmem [resolvable:$true] %s766
          %769 = dma.vmem_to_hbm [thread:$0]  %s767, 16, %s764, %s754
        $region76: #{tpu_custom_call.1} parent=55 // pred_fallthru
          _
      $region56: #{tpu_custom_call.1} parent=5 // pred_fallthru
        _
      %p770 = scmp.le.s32.totalorder 2, %s25
      // Predicated region
      $region77: #{tpu_custom_call.1} parent=5 // pred_check
        %p771 = pneg %p770
      $region78: #{tpu_custom_call.1} parent=5 // pred_check_branch
        %773 = sbr.rel (%p771) target = $region80
      $region79: #{tpu_custom_call.1} parent=5 // pred_region
        %s774 = ssub.s32 %s25, 2
        // Predicated region
        $region81: #{tpu_custom_call.1} parent=79 // pred_check
          %p775 = pneg %p248
        $region82: #{tpu_custom_call.1} parent=79 // pred_check_branch
          %777 = sbr.rel (%p775) target = $region84
        $region83: #{tpu_custom_call.1} parent=79 // pred_region
          %s778 = sand.u32 %s233, 1
          %s779 = scalar_lea.sflag [#allocation5], %s778
          %s780 = sand.u32 %s233, 1
          %s781 = scalar_lea.vmem [#allocation11], %s780
          %782 = dma.done %s779, 16
        $region84: #{tpu_custom_call.1} parent=79 // pred_fallthru
          _
      $region80: #{tpu_custom_call.1} parent=5 // pred_fallthru
        _
    $region6: #{tpu_custom_call.1} parent=1 // loop_footer
      %s29 = sadd.s32 1, %s25
    $region7: #{tpu_custom_call.1} parent=1 // loop_footer_branch
      %24 = sbr.rel target = $region3
    $region8: #{tpu_custom_call.1} parent=1 // loop_exit
      _
    %783 = vsyncpa [#allocation4], 1
    %s784 = scalar_lea.sflag [#allocation4], 1
    %785 = vsyncpa %s784, 1
    %786 = vsyncpa [#allocation7], 1
    %787 = vsyncpa [#allocation10], 1
    %788 = vsyncpa [#allocation5], 1
    %s789 = scalar_lea.sflag [#allocation5], 1
    %790 = vsyncpa %s789, 1

</llo_original>
